<compile_context>
chip_gen: v7x
topology: tpu7x:2x2x1
jax: 0.10.0
libtpu: 0.0.40
codegen_flags: <defaults>
</compile_context>

<pallas_src>
import functools

import jax
import jax.numpy as jnp
from jax.experimental import pallas as pl
from jax.experimental.pallas import tpu as pltpu


def _pick_row_tile(n_rows, bytes_per_row, target_bytes=4 * 1024 * 1024):
    """Largest row tile that is a multiple of 8 and divides n_rows (or n_rows
    itself when that is impossible), keeping the block under target_bytes."""
    if n_rows % 8 != 0:
        return n_rows
    cands = [t for t in range(8, n_rows + 1, 8) if n_rows % t == 0]
    sized = [t for t in cands if t * bytes_per_row <= target_bytes]
    return max(sized) if sized else min(cands)


# ---------------------------------------------------------------------------
# Kernel 1: k x k max-pool (stride k) on an NCHW seg map  (forward() hot path)
# ---------------------------------------------------------------------------
def _shift_down_lanes(a, s):
    """out[:, i] = a[:, i - s] (circular), s static.  == jnp.roll(a, s, axis=1)."""
    n = a.shape[-1]
    return jnp.concatenate([a[:, n - s:], a[:, : n - s]], axis=-1)


def _maxpool_kernel(x_ref, sel_ref, o_ref, *, k, ho_t):
    # x_ref: (ho_t*k, W) tile of the (B*C, H, W) seg map.
    # ---- H reduction: k sublane-strided, full-lane-width maxes (VPU) ----
    acc = x_ref[pl.ds(0, ho_t, stride=k), :]
    for di in range(1, k):
        acc = jnp.maximum(acc, x_ref[pl.ds(di, ho_t, stride=k), :])
    # acc[r, w] = max over the k input rows feeding output row r.

    # ---- W reduction: log2(k) lane shifts + max ----
    s = 1
    while s < k:
        acc = jnp.maximum(acc, _shift_down_lanes(acc, s))
        s *= 2
    # acc[r, j*k + k - 1] = max over lanes [j*k, j*k + k) (no wraparound can
    # reach those lanes, and wraparound keeps all values finite for the dot).

    # ---- compact every k-th lane with a one-hot gather matmul (MXU) ----
    out = jnp.dot(acc.astype(jnp.float32), sel_ref[...],
                  preferred_element_type=jnp.float32)
    o_ref[...] = out.astype(o_ref.dtype)


def maxpool2d_pallas(x, k):
    """nn.MaxPool2d(kernel_size=k) on an NCHW tensor, transpose-free."""
    B, C, H, W = x.shape
    assert H % k == 0 and W % k == 0, "spatial dims must be divisible by pool size"
    assert k & (k - 1) == 0, "pool size must be a power of two (2..32)"
    Ho, Wo = H // k, W // k

    x2 = x.reshape(B * C, H, W)                     # free: last two dims unchanged
    ho_t = _pick_row_tile(Ho, k * W * x.dtype.itemsize)
    n_ho = Ho // ho_t

    # one-hot gather matrix: sel[w, j] = 1 iff w == j*k + (k-1)   (exact extract)
    sel = (jnp.arange(W, dtype=jnp.int32)[:, None]
           == (jnp.arange(Wo, dtype=jnp.int32)[None, :] * k + (k - 1))
           ).astype(jnp.float32)

    out = pl.pallas_call(
        functools.partial(_maxpool_kernel, k=k, ho_t=ho_t),
        out_shape=jax.ShapeDtypeStruct((B * C, Ho, Wo), x.dtype),
        grid=(B * C, n_ho),
        in_specs=[
            pl.BlockSpec((None, ho_t * k, W), lambda bc, h: (bc, h, 0)),
            pl.BlockSpec((W, Wo), lambda bc, h: (0, 0)),   # constant -> fetched once
        ],
        out_specs=pl.BlockSpec((None, ho_t, Wo), lambda bc, h: (bc, h, 0)),
        compiler_params=pltpu.CompilerParams(
            dimension_semantics=("parallel", "parallel")),
    )(x2, sel)
    return out.reshape(B, C, Ho, Wo)                # free: last two dims unchanged


# ---------------------------------------------------------------------------
# Kernel 2: 1x1 Conv2d(C -> 1) as a VPU weighted channel sum (no MXU).
# ---------------------------------------------------------------------------
def _conv1x1_kernel(w_ref, b_ref, x_ref, o_ref, *, C):
    # w_ref: (C,) f32 in SMEM, b_ref: (1,) f32 in SMEM, x_ref: (C, h_t, w) VMEM.
    acc = x_ref[0].astype(jnp.float32) * w_ref[0]
    for c in range(1, C):                           # C is small; unrolled VPU FMAs
        acc = acc + x_ref[c].astype(jnp.float32) * w_ref[c]
    o_ref[...] = (acc + b_ref[0]).astype(o_ref.dtype)


def conv1x1_pallas(x, weight, bias):
    """nn.Conv2d(C, 1, kernel_size=1) on an NCHW tensor."""
    B, C, h, w = x.shape
    wvec = weight.reshape(C).astype(jnp.float32)
    bvec = bias.reshape(1).astype(jnp.float32)
    h_t = _pick_row_tile(h, C * w * x.dtype.itemsize)
    n_h = h // h_t

    out = pl.pallas_call(
        functools.partial(_conv1x1_kernel, C=C),
        out_shape=jax.ShapeDtypeStruct((B, 1, h, w), x.dtype),
        grid=(B, n_h),
        in_specs=[
            pl.BlockSpec(memory_space=pltpu.MemorySpace.SMEM),   # weight (C,)
            pl.BlockSpec(memory_space=pltpu.MemorySpace.SMEM),   # bias (1,)
            pl.BlockSpec((None, C, h_t, w), lambda b, hb: (b, 0, hb, 0)),
        ],
        out_specs=pl.BlockSpec((None, None, h_t, w), lambda b, hb: (b, 0, hb, 0)),
        compiler_params=pltpu.CompilerParams(
            dimension_semantics=("parallel", "parallel")),
    )(wvec, bvec, x)
    return out


# ---------------------------------------------------------------------------
# Module wrapper
# ---------------------------------------------------------------------------
_STAGE_TO_K = {"1_2": 2, "1_4": 4, "1_8": 8, "1_16": 16, "1_32": 32}


class AttentionDownPallas:
    def __init__(self, in_chan_act_map, att_stage, key):
        if att_stage not in _STAGE_TO_K:
            raise ValueError(
                f"att_stage: {att_stage} invalid. Choices: {list(_STAGE_TO_K)}"
            )
        self.att_stage = att_stage
        self.pool_k = _STAGE_TO_K[att_stage]
        self.in_chan_act_map = in_chan_act_map
        # deterministic init of att_conv params (Conv2d(C, 1, 1): weight (1,C,1,1), bias (1,))
        kw, kb = jax.random.split(key)
        bound = 1.0 / jnp.sqrt(jnp.float32(in_chan_act_map))
        self.att_conv_weight = jax.random.uniform(
            kw, (1, in_chan_act_map, 1, 1), jnp.float32, -bound, bound
        )
        self.att_conv_bias = jax.random.uniform(kb, (1,), jnp.float32, -bound, bound)

    def forward(self, act_map, seg_map):
        # Exactly what the (truncated) reference forward computes:
        seg_map_down = maxpool2d_pallas(seg_map, self.pool_k)
        return seg_map_down


if __name__ == "__main__":
    key = jax.random.PRNGKey(0)
    k_mod, k_act, k_seg = jax.random.split(key, 3)

    in_chan_act_map = 4
    att_stage = "1_4"            # pool kernel 4
    B, C_seg, H, W = 2, 1, 64, 64
    h, w = H // 4, W // 4        # act_map spatial matches the 1/4 stage

    module = AttentionDownPallas(in_chan_act_map, att_stage, k_mod)

    act_map = jax.random.normal(k_act, (B, in_chan_act_map, h, w), jnp.float32)
    seg_map = jax.random.normal(k_seg, (B, C_seg, H, W), jnp.float32)

    # forward pass (Pallas maxpool)
    seg_down = jax.block_until_ready(module.forward(act_map, seg_map))

    # reference check for the pool (tolerance allows for the MXU one-hot gather)
    kpool = module.pool_k
    ref_pool = seg_map.reshape(B, C_seg, H // kpool, kpool, W // kpool, kpool).max(
        axis=(3, 5)
    )
    assert seg_down.shape == (B, C_seg, H // kpool, W // kpool)
    assert jnp.allclose(seg_down, ref_pool, atol=2e-2, rtol=2e-2), "maxpool mismatch"

    # exercise the att_conv Pallas kernel declared in __init__ (not part of the
    # truncated reference forward) and check against an elementwise reference.
    att = jax.block_until_ready(
        conv1x1_pallas(act_map, module.att_conv_weight, module.att_conv_bias)
    )
    ref_conv = (
        (act_map * module.att_conv_weight.reshape(1, -1, 1, 1)).sum(
            axis=1, keepdims=True
        )
        + module.att_conv_bias.reshape(1, 1, 1, 1)
    )
    assert att.shape == (B, 1, h, w)
    assert jnp.allclose(att, ref_conv, atol=1e-4), "1x1 conv mismatch"

    print("KERNEL_OK")
</pallas_src>

<mosaic_0001>
module attributes {stable_mosaic.version = 11 : i64} {
  func.func @_maxpool_kernel(%arg0: i32, %arg1: i32, %arg2: memref<1x64x64xf32, #tpu.memory_space<vmem>>, %arg3: memref<64x16xf32, #tpu.memory_space<vmem>>, %arg4: memref<1x16x16xf32, #tpu.memory_space<vmem>>) attributes {dimension_semantics = [#tpu.dimension_semantics<parallel>, #tpu.dimension_semantics<parallel>], iteration_bounds = array<i64: 2, 1>, scalar_prefetch = 0 : i64, scratch_operands = 0 : i64, tpu.core_type = #tpu.core_type<tc>, window_params = [{transform_indices = @transform_0, window_bounds = array<i64: 1, 64, 64>}, {pipeline_mode = #tpu.pipeline_mode<synchronous>, transform_indices = @transform_1, window_bounds = array<i64: 64, 16>}, {transform_indices = @transform_2, window_bounds = array<i64: 1, 16, 16>}]} {
    %c0 = arith.constant 0 : index
    %c0_0 = arith.constant 0 : index
    %c0_1 = arith.constant 0 : index
    %0 = tpu.strided_load %arg2[%c0, %c0_0, %c0_1] {strides = array<i32: 1, 4, 1>} : memref<1x64x64xf32, #tpu.memory_space<vmem>>, vector<1x16x64xf32>
    %1 = vector.shape_cast %0 : vector<1x16x64xf32> to vector<16x64xf32>
    %c0_2 = arith.constant 0 : index
    %c1 = arith.constant 1 : index
    %c0_3 = arith.constant 0 : index
    %2 = tpu.strided_load %arg2[%c0_2, %c1, %c0_3] {strides = array<i32: 1, 4, 1>} : memref<1x64x64xf32, #tpu.memory_space<vmem>>, vector<1x16x64xf32>
    %3 = vector.shape_cast %2 : vector<1x16x64xf32> to vector<16x64xf32>
    %4 = arith.maximumf %1, %3 : vector<16x64xf32>
    %c0_4 = arith.constant 0 : index
    %c2 = arith.constant 2 : index
    %c0_5 = arith.constant 0 : index
    %5 = tpu.strided_load %arg2[%c0_4, %c2, %c0_5] {strides = array<i32: 1, 4, 1>} : memref<1x64x64xf32, #tpu.memory_space<vmem>>, vector<1x16x64xf32>
    %6 = vector.shape_cast %5 : vector<1x16x64xf32> to vector<16x64xf32>
    %7 = arith.maximumf %4, %6 : vector<16x64xf32>
    %c0_6 = arith.constant 0 : index
    %c3 = arith.constant 3 : index
    %c0_7 = arith.constant 0 : index
    %8 = tpu.strided_load %arg2[%c0_6, %c3, %c0_7] {strides = array<i32: 1, 4, 1>} : memref<1x64x64xf32, #tpu.memory_space<vmem>>, vector<1x16x64xf32>
    %9 = vector.shape_cast %8 : vector<1x16x64xf32> to vector<16x64xf32>
    %10 = arith.maximumf %7, %9 : vector<16x64xf32>
    %11 = vector.extract_strided_slice %10 {offsets = [0, 63], sizes = [16, 1], strides = [1, 1]} : vector<16x64xf32> to vector<16x1xf32>
    %12 = vector.extract_strided_slice %10 {offsets = [0, 0], sizes = [16, 63], strides = [1, 1]} : vector<16x64xf32> to vector<16x63xf32>
    %13 = tpu.concatenate %11, %12 in 1 : vector<16x1xf32>, vector<16x63xf32> -> vector<16x64xf32>
    %14 = arith.maximumf %10, %13 : vector<16x64xf32>
    %15 = vector.extract_strided_slice %14 {offsets = [0, 62], sizes = [16, 2], strides = [1, 1]} : vector<16x64xf32> to vector<16x2xf32>
    %16 = vector.extract_strided_slice %14 {offsets = [0, 0], sizes = [16, 62], strides = [1, 1]} : vector<16x64xf32> to vector<16x62xf32>
    %17 = tpu.concatenate %15, %16 in 1 : vector<16x2xf32>, vector<16x62xf32> -> vector<16x64xf32>
    %18 = arith.maximumf %14, %17 : vector<16x64xf32>
    %c0_8 = arith.constant 0 : index
    %c0_9 = arith.constant 0 : index
    %19 = vector.load %arg3[%c0_8, %c0_9] : memref<64x16xf32, #tpu.memory_space<vmem>>, vector<64x16xf32>
    %cst = arith.constant dense<0.000000e+00> : vector<16x16xf32>
    %20 = tpu.matmul %18, %19, %cst {dimension_numbers = #tpu.dot_dimension_numbers<[1], [0], [0], [1], [0, 0, 1, 1], [], []>} : vector<16x64xf32>, vector<64x16xf32>, vector<16x16xf32> -> vector<16x16xf32>
    %c0_10 = arith.constant 0 : index
    %c0_11 = arith.constant 0 : index
    %c0_12 = arith.constant 0 : index
    %21 = vector.load %arg4[%c0_10, %c0_11, %c0_12] : memref<1x16x16xf32, #tpu.memory_space<vmem>>, vector<1x16x16xf32>
    %22 = vector.shape_cast %21 : vector<1x16x16xf32> to vector<16x16xf32>
    %23 = vector.shape_cast %20 : vector<16x16xf32> to vector<1x16x16xf32>
    tpu.vector_store %arg4[%c0_10, %c0_11, %c0_12], %23 {strides = array<i32>} : memref<1x16x16xf32, #tpu.memory_space<vmem>>, vector<1x16x16xf32>,
    return
  }
  func.func @transform_0(%arg0: i32, %arg1: i32) -> (i32, i32, i32) {
    %c0_i32 = arith.constant 0 : i32
    %c0_i32_0 = arith.constant 0 : i32
    return %arg0, %arg1, %c0_i32 : i32, i32, i32
  }
  func.func @transform_1(%arg0: i32, %arg1: i32) -> (i32, i32) {
    %c0_i32 = arith.constant 0 : i32
    %c0_i32_0 = arith.constant 0 : i32
    %c0_i32_1 = arith.constant 0 : i32
    return %c0_i32, %c0_i32_0 : i32, i32
  }
  func.func @transform_2(%arg0: i32, %arg1: i32) -> (i32, i32, i32) {
    %c0_i32 = arith.constant 0 : i32
    %c0_i32_0 = arith.constant 0 : i32
    return %arg0, %arg1, %c0_i32 : i32, i32, i32
  }
}

</mosaic_0001>

<llo_original>
// kernel: tpu_custom_call.1
$region0: #{tpu_custom_call.1}
  #allocation0 [shape = 'u32[]', space=smem, size = 0x4, offset = 0x4, fixed_abs, tag = 'smem constant byte address 0x4 - core index']
  #allocation1 [shape = 'u32[144,128]{1,0:T(1,128)}', space=vmem, size = 0x12000, scoped, tag = 'internal scratch']
  %s0 = inlined_call_operand.hbm [shape: f32[2,64,64], index: 0, kind: input, shape index: {}]
  %s1 = inlined_call_operand.vmem [shape: f32[64,16], index: 1, kind: input, shape index: {}]
  %s2 = inlined_call_operand.hbm [shape: f32[2,16,16], index: 2, kind: output, shape index: {}]
  %s3 = sld [smem:[#allocation0]]
  $region45: #{tpu_custom_call.1} parent=0
    _
  %s5 = ssub.s32 1, %s3
  %s6 = scalar_select 0, %s5, %s3
  $region1: #{tpu_custom_call.1} parent=0
    #allocation2 [shape = 'u8[65536]{0}', space=vmem, size = 0x10000, scoped, tag = 'input window, operand 0']
    #allocation3 [shape = 's32[2]{0}', space=sflag, size = 0x8, scoped, tag = 'scoped memory for tpu_custom_call.1']
    #allocation4 [shape = 's32[2]{0}', space=sflag, size = 0x8, scoped, tag = 'scoped memory for tpu_custom_call.1']
    #allocation5 [shape = 'u8[16384]{0}', space=vmem, size = 0x4000, scoped, tag = 'output window, operand 0']
    %7 = vsyncpa [#allocation3], 0
    %s8 = scalar_lea.sflag [#allocation3], 1
    %9 = vsyncpa %s8, 0
    %10 = vsyncpa [#allocation4], 0
    %s11 = scalar_lea.sflag [#allocation4], 1
    %12 = vsyncpa %s11, 0
    loop: start=0, step=1, limit=4
    $region2: #{tpu_custom_call.1} parent=1 // loop_pre_header
      _
    $region3: #{tpu_custom_call.1} parent=1 // loop_header
      %s14 = sphi 0, %s18
      %p15 = scmp.ge.s32.totalorder %s14, 4
      %s21 = sphi 0, %s33
      %s22 = sphi 0, %s29
      %s23 = sphi 0, %s21
      %s24 = sphi 0, %s22
      %s25 = sphi 0, %s23
      %s26 = sphi 0, %s24
      %s38 = sphi 0, %s40
      %s41 = sphi 0, %s38
      %s42 = sphi 0, %s41
      %s58 = sphi 0, %s42
      %s62 = sphi 0, %s62
      %s64 = sphi 0, %s62
      %s65 = sphi 0, %s64
      %s79 = sphi 0, %s65
      %s87 = sphi 0, %s89
      %s90 = sphi 0, %s87
      %s91 = sphi 0, %s90
      %s107 = sphi 0, %s91
    $region4: #{tpu_custom_call.1} parent=1 // loop_header_branch
      %17 = sbr.rel (%p15) target = $region8
    $region5: #{tpu_custom_call.1} parent=1 // loop_body
      %s19 = ssub.s32 %s14, 1
      %s20 = ssub.s32 %s14, 2
      %s27 = sadd.s32 1, %s22
      %p28 = scmp.ge.s32.totalorder %s27, 1
      %s29 = scalar_select %p28, 0, %s27
      %s30 = sadd.s32 1, %s21
      %s31 = scalar_select %p28, %s30, %s21
      %p32 = scmp.ge.s32.totalorder %s31, 2
      %s33 = scalar_select %p32, 0, %s31
      %s34 = ssub.s32 %s21, %s33
      %s35 = ssub.s32 %s22, %s29
      %s36 = sor.u32 %s34, %s35
      %p37 = scmp.eq.s32.totalorder %s36, 0
      %s39 = sadd.s32 %s38, 1
      %s40 = scalar_select %p37, %s38, %s39
      %p43 = pneg %p37
      %p44 = scmp.eq.s32.totalorder %s14, 1
      %p45 = por %p43, %p44
      %p46 = scmp.ne.s32.totalorder %s38, %s41
      %p47 = scmp.eq.s32.totalorder %s14, 0
      %p48 = por %p46, %p47
      %p49 = scmp.ne.s32.totalorder %s38, %s41
      %p50 = scmp.eq.s32.totalorder %s19, 1
      %p51 = por %p49, %p50
      %p52 = scmp.ne.s32.totalorder %s41, %s42
      %p53 = scmp.eq.s32.totalorder %s19, 0
      %p54 = por %p52, %p53
      %p55 = scmp.ne.s32.totalorder %s41, %s42
      %p56 = scmp.eq.s32.totalorder %s20, 1
      %p57 = por %p55, %p56
      %p59 = scmp.ne.s32.totalorder %s42, %s58
      %p60 = scmp.eq.s32.totalorder %s20, 0
      %p61 = por %p59, %p60
      %s63 = sadd.s32 %s62, 1
      %p66 = scmp.eq.s32.totalorder %s14, 1
      %p67 = scmp.ne.s32.totalorder %s62, %s64
      %p68 = scmp.eq.s32.totalorder %s14, 0
      %p69 = por %p67, %p68
      %p70 = scmp.ne.s32.totalorder %s62, %s64
      %p71 = scmp.eq.s32.totalorder %s19, 1
      %p72 = por %p70, %p71
      %p73 = scmp.ne.s32.totalorder %s64, %s65
      %p74 = scmp.eq.s32.totalorder %s19, 0
      %p75 = por %p73, %p74
      %p76 = scmp.ne.s32.totalorder %s64, %s65
      %p77 = scmp.eq.s32.totalorder %s20, 1
      %p78 = por %p76, %p77
      %p80 = scmp.ne.s32.totalorder %s65, %s79
      %p81 = scmp.eq.s32.totalorder %s20, 0
      %p82 = por %p80, %p81
      %s83 = ssub.s32 %s21, %s33
      %s84 = ssub.s32 %s22, %s29
      %s85 = sor.u32 %s83, %s84
      %p86 = scmp.eq.s32.totalorder %s85, 0
      %s88 = sadd.s32 %s87, 1
      %s89 = scalar_select %p86, %s87, %s88
      %p92 = pneg %p86
      %p93 = scmp.eq.s32.totalorder %s14, 1
      %p94 = por %p92, %p93
      %p95 = scmp.ne.s32.totalorder %s87, %s90
      %p96 = scmp.eq.s32.totalorder %s14, 0
      %p97 = por %p95, %p96
      %p98 = scmp.ne.s32.totalorder %s87, %s90
      %p99 = scmp.eq.s32.totalorder %s19, 1
      %p100 = por %p98, %p99
      %p101 = scmp.ne.s32.totalorder %s90, %s91
      %p102 = scmp.eq.s32.totalorder %s19, 0
      %p103 = por %p101, %p102
      %p104 = scmp.ne.s32.totalorder %s90, %s91
      %p105 = scmp.eq.s32.totalorder %s20, 1
      %p106 = por %p104, %p105
      %p108 = scmp.ne.s32.totalorder %s91, %s107
      %p109 = scmp.eq.s32.totalorder %s20, 0
      %p110 = por %p108, %p109
      %p111 = scmp.le.s32.totalorder 1, %s14
      %p112 = scmp.lt.s32.totalorder %s14, 3
      %p113 = pnand %p111, %p112
      %p114 = pneg %p113
      // Predicated region
      $region9: #{tpu_custom_call.1} parent=5 // pred_check
        _
      $region10: #{tpu_custom_call.1} parent=5 // pred_check_branch
        %116 = sbr.rel (%p113) target = $region12
      $region11: #{tpu_custom_call.1} parent=5 // pred_region
        %s117 = ssub.s32 %s14, 1
        // Predicated region
        $region13: #{tpu_custom_call.1} parent=11 // pred_check
          %p118 = pneg %p75
        $region14: #{tpu_custom_call.1} parent=11 // pred_check_branch
          %120 = sbr.rel (%p118) target = $region16
        $region15: #{tpu_custom_call.1} parent=11 // pred_region
          _
        $region16: #{tpu_custom_call.1} parent=11 // pred_fallthru
          _
      $region12: #{tpu_custom_call.1} parent=5 // pred_fallthru
        _
      %p121 = scmp.lt.s32.totalorder %s14, 2
      // Predicated region
      $region17: #{tpu_custom_call.1} parent=5 // pred_check
        %p122 = pneg %p121
      $region18: #{tpu_custom_call.1} parent=5 // pred_check_branch
        %124 = sbr.rel (%p122) target = $region20
      $region19: #{tpu_custom_call.1} parent=5 // pred_region
        // Predicated region
        $region21: #{tpu_custom_call.1} parent=19 // pred_check
          %p125 = pneg %p48
        $region22: #{tpu_custom_call.1} parent=19 // pred_check_branch
          %127 = sbr.rel (%p125) target = $region24
        $region23: #{tpu_custom_call.1} parent=19 // pred_region
          %s128 = sand.u32 %s38, 1
          %s129 = scalar_lea.sflag [#allocation3], %s128
          %s130 = sand.u32 %s38, 1
          %s131 = smul.addr %s130, 64
          %s132 = scalar_lea.vmem [#allocation2], %s131
          %s133 = smul.u32 8, %s22
          %s135 = ssub.s32 1024, 1024
          %136 = vsyncadd %s129, %s135
          %s137 = smul.addr %s21, 8
          %s138 = sadd.s32 %s133, %s137
          %s139 = smul.addr %s138, 128
          %s140 = scalar_lea.hbm %s0, %s139
          %s141 = sshll.u32 %s132, 4
          %s142 = int_to_ptr.vmem [resolvable:$true] %s141
          %147 = dma.hbm_to_vmem [thread:$0]  %s140, 1024, %s142, %s129, 128, 128, 8
        $region24: #{tpu_custom_call.1} parent=19 // pred_fallthru
          _
      $region20: #{tpu_custom_call.1} parent=5 // pred_fallthru
        _
      %p148 = scmp.le.s32.totalorder 1, %s14
      %p149 = scmp.lt.s32.totalorder %s14, 3
      %p150 = pnand %p148, %p149
      %p151 = pneg %p150
      // Predicated region
      $region25: #{tpu_custom_call.1} parent=5 // pred_check
        _
      $region26: #{tpu_custom_call.1} parent=5 // pred_check_branch
        %153 = sbr.rel (%p150) target = $region28
      $region27: #{tpu_custom_call.1} parent=5 // pred_region
        %s154 = ssub.s32 %s14, 1
        %s155 = sand.u32 %s41, 1
        %s156 = scalar_lea.sflag [#allocation3], %s155
        %s157 = sand.u32 %s41, 1
        %s158 = smul.addr %s157, 64
        %s159 = scalar_lea.vmem [#allocation2], %s158
        // Predicated region
        $region29: #{tpu_custom_call.1} parent=27 // pred_check
          %p160 = pneg %p54
        $region30: #{tpu_custom_call.1} parent=27 // pred_check_branch
          %162 = sbr.rel (%p160) target = $region32
        $region31: #{tpu_custom_call.1} parent=27 // pred_region
          %163 = dma.done %s156, 1024
        $region32: #{tpu_custom_call.1} parent=27 // pred_fallthru
          _
        %s164 = sand.u32 %s41, 1
        %s165 = scalar_lea.sflag [#allocation3], %s164
        %s166 = sand.u32 %s41, 1
        %s167 = smul.addr %s166, 64
        %s168 = scalar_lea.vmem [#allocation2], %s167
        %p169 = pneg %p54
        %p170 = pneg %p51
        %p171 = pneg %p75
        %p172 = pneg %p72
        %p173 = pneg %p103
        %p174 = pneg %p100
        %s175 = sand.u32 %s90, 1
        %s176 = scalar_lea.sflag [#allocation4], %s175
        %s177 = sand.u32 %s90, 1
        %s178 = smul.addr %s177, 16
        %s179 = scalar_lea.vmem [#allocation5], %s178
        %s180 = smul.u32 8, %s24
        %s181 = smul.u32 2, %s24
        %v182 = vld [vmem:[%s159] ss:$4 sm:$0xff]
        %s183 = scalar_lea.vmem %s159, 32 [#allocation2]
        %v184 = vld [vmem:[%s183] ss:$4 sm:$0xff]
        %s185 = scalar_lea.vmem %s159, 1 [#allocation2]
        %v186 = vld [vmem:[%s185] ss:$4 sm:$0xff]
        %s187 = scalar_lea.vmem %s159, 33 [#allocation2]
        %v188 = vld [vmem:[%s187] ss:$4 sm:$0xff]
        %v189 = vmax.f32 %v182, %v186
        %v190 = vmax.f32 %v184, %v188
        %s191 = scalar_lea.vmem %s159, 2 [#allocation2]
        %v192 = vld [vmem:[%s191] ss:$4 sm:$0xff]
        %s193 = scalar_lea.vmem %s159, 34 [#allocation2]
        %v194 = vld [vmem:[%s193] ss:$4 sm:$0xff]
        %v195 = vmax.f32 %v189, %v192
        %v196 = vmax.f32 %v190, %v194
        %s197 = scalar_lea.vmem %s159, 3 [#allocation2]
        %v198 = vld [vmem:[%s197] ss:$4 sm:$0xff]
        %s199 = scalar_lea.vmem %s159, 35 [#allocation2]
        %v200 = vld [vmem:[%s199] ss:$4 sm:$0xff]
        %v201 = vmax.f32 %v195, %v198
        %v202 = vmax.f32 %v196, %v200
        %205 = vrot.lane.b32.xlu0 %v201, 65
        %v206 = vpop.permute.xlu0 %205
        %207 = vrot.lane.b32.xlu0 %v202, 65
        %v208 = vpop.permute.xlu0 %207
        %211 = vrot.lane.b32.xlu0 %v201, 1
        %v212 = vpop.permute.xlu0 %211
        %213 = vrot.lane.b32.xlu0 %v202, 1
        %v214 = vpop.permute.xlu0 %213
        %vm217 = vcmask 7168
        %v218 = vsel %vm217, %v206, %v212
        %v219 = vsel %vm217, %v208, %v214
        %v220 = vmax.f32 %v201, %v218
        %v221 = vmax.f32 %v202, %v219
        %224 = vrot.lane.b32.xlu0 %v220, 66
        %v225 = vpop.permute.xlu0 %224
        %226 = vrot.lane.b32.xlu0 %v221, 66
        %v227 = vpop.permute.xlu0 %226
        %230 = vrot.lane.b32.xlu0 %v220, 2
        %v231 = vpop.permute.xlu0 %230
        %232 = vrot.lane.b32.xlu0 %v221, 2
        %v233 = vpop.permute.xlu0 %232
        %vm236 = vcmask 15360
        %v237 = vsel %vm236, %v225, %v231
        %v238 = vsel %vm236, %v227, %v233
        %v239 = vmax.f32 %v220, %v237
        %v240 = vmax.f32 %v221, %v238
        %v241 = vld [vmem:[%s1] sm:$0xff]
        %v242 = vld [vmem:[%s1 + $0x8] sm:$0xff]
        %v243 = vld [vmem:[%s1 + $0x10] sm:$0xff]
        %v244 = vld [vmem:[%s1 + $0x18] sm:$0xff]
        %v245 = vld [vmem:[%s1 + $0x20] sm:$0xff]
        %v246 = vld [vmem:[%s1 + $0x28] sm:$0xff]
        %v247 = vld [vmem:[%s1 + $0x30] sm:$0xff]
        %v248 = vld [vmem:[%s1 + $0x38] sm:$0xff]
        %vm249 = vcmask 523264
        %v251 = vsel %vm249, %v239, 0
        %v254 = vsel %vm249, %v240, 0
        %256 = vmatprep.subr.mxu0 0.0
        %257 = vmatpush1.msra.mxu0 %v241
        %258 = vmatprep.subr.mxu0 0.0
        %259 = vmatpush1.msra.mxu0 %v242
        %260 = vmatprep.subr.mxu0 0.0
        %261 = vmatpush1.msra.mxu0 %v243
        %262 = vmatprep.subr.mxu0 0.0
        %263 = vmatpush1.msra.mxu0 %v244
        %264 = vmatprep.subr.mxu0 0.0
        %265 = vmatpush1.msra.mxu0 %v245
        %266 = vmatprep.subr.mxu0 0.0
        %267 = vmatpush1.msra.mxu0 %v246
        %268 = vmatprep.subr.mxu0 0.0
        %269 = vmatpush1.msra.mxu0 %v247
        %270 = vmatprep.subr.mxu0 0.0
        %271 = vmatpush1.msra.mxu0 %v248
        %272 = vmatprep.subr.mxu0 0.0
        %273 = vmatpush1.msra.mxu0 0.0
        %274 = vmatprep.subr.mxu0 0.0
        %275 = vmatpush1.msra.mxu0 0.0
        %276 = vmatprep.subr.mxu0 0.0
        %277 = vmatpush1.msra.mxu0 0.0
        %278 = vmatprep.subr.mxu0 0.0
        %279 = vmatpush1.msra.mxu0 0.0
        %280 = vmatprep.subr.mxu0 0.0
        %281 = vmatpush1.msra.mxu0 0.0
        %282 = vmatprep.subr.mxu0 0.0
        %283 = vmatpush1.msra.mxu0 0.0
        %284 = vmatprep.subr.mxu0 0.0
        %285 = vmatpush1.msra.mxu0 0.0
        %286 = vmatprep.subr.mxu0 0.0
        %287 = vmatpush1.msra.mxu0 0.0
        %288 = vmatprep.subr.mxu0 0.0
        %289 = vmatpush1.msra.mxu0 0.0
        %290 = vmatprep.subr.mxu0 0.0
        %291 = vmatpush1.msra.mxu0 0.0
        %292 = vmatprep.subr.mxu0 0.0
        %293 = vmatpush1.msra.mxu0 0.0
        %294 = vmatprep.subr.mxu0 0.0
        %295 = vmatpush1.msra.mxu0 0.0
        %296 = vmatprep.subr.mxu0 0.0
        %297 = vmatpush1.msra.mxu0 0.0
        %298 = vmatprep.subr.mxu0 0.0
        %299 = vmatpush1.msra.mxu0 0.0
        %300 = vmatprep.subr.mxu0 0.0
        %301 = vmatpush1.msra.mxu0 0.0
        %302 = vmatprep.subr.mxu0 0.0
        %303 = vmatpush1.msra.mxu0 0.0
        %304 = vmatprep.subr.mxu0 0.0
        %305 = vmatpush1.msra.mxu0 0.0
        %306 = vmatprep.subr.mxu0 0.0
        %307 = vmatpush1.msra.mxu0 0.0
        %308 = vmatprep.subr.mxu0 0.0
        %309 = vmatpush1.msra.mxu0 0.0
        %310 = vmatprep.subr.mxu0 0.0
        %311 = vmatpush1.msra.mxu0 0.0
        %312 = vmatprep.subr.mxu0 0.0
        %313 = vmatpush1.msra.mxu0 0.0
        %314 = vmatprep.subr.mxu0 0.0
        %315 = vmatpush1.msra.mxu0 0.0
        %316 = vmatprep.subr.mxu0 0.0
        %317 = vmatpush1.msra.mxu0 0.0
        %318 = vmatprep.subr.mxu0 0.0
        %319 = vmatpush1.msra.mxu0 0.0
        %320 = vmatprep.mubr.f32.mxu0 0.0
        %321 = vmatmul.mubr.f32.gmra.mrb[0].mxu0 %v251
        %v322 = vpop.f32.mrb[0].mxu0
        %v323 = vadd.f32 0.0, %v322
        %v324 = vpop.f32.mrb[0].mxu0
        %325 = vmatprep.mubr.f32.mxu0 0.0
        %326 = vmatmul.mubr.f32.gmra.mrb[0].mxu0 %v254
        %v327 = vpop.f32.mrb[0].mxu0
        %v328 = vadd.f32 0.0, %v327
        %v329 = vpop.f32.mrb[0].mxu0
        %330 = vdwg.mxu0
        %vm331 = vcmask 130048
        %332 = vst.msk [vmem:[%s179] sm:$0xff] %vm331, %v323
        %333 = vst.msk [vmem:[%s179 + $0x8] sm:$0xff] %vm331, %v328
        %s334 = sand.u32 %s90, 1
        %s335 = scalar_lea.sflag [#allocation4], %s334
        %s336 = sand.u32 %s90, 1
        %s337 = smul.addr %s336, 16
        %s338 = scalar_lea.vmem [#allocation5], %s337
        // Predicated region
        $region33: #{tpu_custom_call.1} parent=27 // pred_check
          %p339 = pneg %p100
        $region34: #{tpu_custom_call.1} parent=27 // pred_check_branch
          %341 = sbr.rel (%p339) target = $region36
        $region35: #{tpu_custom_call.1} parent=27 // pred_region
          %s342 = smul.u32 2, %s24
          %s344 = ssub.s32 256, 256
          %345 = vsyncadd %s335, %s344
          %s346 = smul.addr %s23, 2
          %s347 = sadd.s32 %s342, %s346
          %s348 = smul.addr %s347, 128
          %s349 = scalar_lea.hbm %s2, %s348
          %s350 = sshll.u32 %s338, 4
          %s351 = int_to_ptr.vmem [resolvable:$true] %s350
          %356 = dma.vmem_to_hbm [thread:$0]  %s351, 256, %s349, %s335, 128, 128, 8
        $region36: #{tpu_custom_call.1} parent=27 // pred_fallthru
          _
      $region28: #{tpu_custom_call.1} parent=5 // pred_fallthru
        _
      %p357 = scmp.le.s32.totalorder 2, %s14
      // Predicated region
      $region37: #{tpu_custom_call.1} parent=5 // pred_check
        %p358 = pneg %p357
      $region38: #{tpu_custom_call.1} parent=5 // pred_check_branch
        %360 = sbr.rel (%p358) target = $region40
      $region39: #{tpu_custom_call.1} parent=5 // pred_region
        %s361 = ssub.s32 %s14, 2
        // Predicated region
        $region41: #{tpu_custom_call.1} parent=39 // pred_check
          %p362 = pneg %p106
        $region42: #{tpu_custom_call.1} parent=39 // pred_check_branch
          %364 = sbr.rel (%p362) target = $region44
        $region43: #{tpu_custom_call.1} parent=39 // pred_region
          %s365 = sand.u32 %s91, 1
          %s366 = scalar_lea.sflag [#allocation4], %s365
          %s367 = sand.u32 %s91, 1
          %s368 = smul.addr %s367, 16
          %s369 = scalar_lea.vmem [#allocation5], %s368
          %370 = dma.done %s366, 256
        $region44: #{tpu_custom_call.1} parent=39 // pred_fallthru
          _
      $region40: #{tpu_custom_call.1} parent=5 // pred_fallthru
        _
    $region6: #{tpu_custom_call.1} parent=1 // loop_footer
      %s18 = sadd.s32 1, %s14
    $region7: #{tpu_custom_call.1} parent=1 // loop_footer_branch
      %13 = sbr.rel target = $region3
    $region8: #{tpu_custom_call.1} parent=1 // loop_exit
      _
    %371 = vsyncpa [#allocation3], 1
    %s372 = scalar_lea.sflag [#allocation3], 1
    %373 = vsyncpa %s372, 1
    %374 = vsyncpa [#allocation4], 1
    %s375 = scalar_lea.sflag [#allocation4], 1
    %376 = vsyncpa %s375, 1

</llo_original>
